<compile_context>
chip_gen: v5e
topology: v5e:2x2
jax: 0.10.0
libtpu: 0.0.40
codegen_flags: <defaults>
</compile_context>

<pallas_src>
import functools

import jax
import jax.numpy as jnp
from jax.experimental import pallas as pl
from jax.experimental.pallas import tpu as pltpu

GAMMA, ZETA = -0.1, 1.1


# ----------------------------- Pallas kernel -------------------------------
def adaround_kernel(x_ref, alpha_ref, inv_delta_ref, delta_ref, zp_ref, out_ref,
                    *, soft_targets: bool, n_levels: int):
    x = x_ref[...]                       # (TM, TN)
    inv_delta = inv_delta_ref[...]       # (TM, 1) broadcast along lanes
    delta = delta_ref[...]               # (TM, 1)
    zp = zp_ref[...]                     # (TM, 1)

    # x / delta  ->  x * (1/delta); reciprocal computed exactly in the wrapper.
    x_floor = jnp.floor(x * inv_delta)

    if soft_targets:
        # get_soft_targets(): clamp(sigmoid(alpha)*(zeta-gamma)+gamma, 0, 1)
        # sigmoid(a) = 0.5*(tanh(0.5*a)+1): single EUP push (vs exp + recip).
        sig = 0.5 * (jnp.tanh(0.5 * alpha_ref[...]) + 1.0)
        h = jnp.clip(sig * (ZETA - GAMMA) + GAMMA, 0.0, 1.0)
    else:
        h = (alpha_ref[...] >= 0.0).astype(x.dtype)

    x_quant = jnp.clip(x_floor + h + zp, 0.0, float(n_levels - 1))
    out_ref[...] = (x_quant - zp) * delta


# --------------------------- wrapper / tiling --------------------------------
def _round_up(v, m):
    return (v + m - 1) // m * m


def _vmem_sizes():
    """(vmem_limit_bytes, working_set_budget_bytes) for the current chip."""
    try:
        phys = int(pltpu.get_tpu_info().vmem_capacity_bytes)
    except Exception:
        phys = 64 * 1024 * 1024            # be conservative (v7x-sized)
    if phys >= 96 * 1024 * 1024:           # v5e / v6e: 128 MiB physical VMEM
        return 96 * 1024 * 1024, 48 * 1024 * 1024
    return 48 * 1024 * 1024, 32 * 1024 * 1024   # v7x: 64 MiB physical VMEM


def adaround_forward(x_flat, alpha_flat, delta_col, zp_col, *,
                     soft_targets: bool, n_levels: int,
                     tm_cap: int = 512, block_elem_cap=None):
    """x_flat, alpha_flat: (OC, K); delta_col, zp_col: (OC, 1). Returns (OC, K) f32."""
    OC, K = x_flat.shape
    vmem_limit, ws_budget = _vmem_sizes()

    # Double-buffered working set ~= 2 * 3 big buffers * TM*TN * 4 bytes
    # (the (TM,1) column buffers are negligible).  Elements per big buffer:
    elem_budget = ws_budget // (2 * 3 * 4)
    if block_elem_cap is not None:          # test hook: force the 2-D tiled path
        elem_budget = min(elem_budget, block_elem_cap)

    # TM: multiple of 8 (sublanes), <= tm_cap, and (when OC allows) <= ~OC/2 so
    # the parallel OC axis has >= 2 blocks for v7x megacore sharding.
    TM = min(_round_up(OC, 8), tm_cap)
    if OC >= 16:
        TM = min(TM, _round_up(pl.cdiv(OC, 2), 8))
    TM = max(TM, 8)

    if TM * K <= elem_budget:
        TN = K                              # full-row blocks, 1-D grid over OC
    else:
        TN = max(512, (elem_budget // TM) // 512 * 512)

    x_flat = x_flat.astype(jnp.float32)
    alpha_flat = alpha_flat.astype(jnp.float32)
    delta_col = delta_col.astype(jnp.float32)
    zp_col = zp_col.astype(jnp.float32)
    inv_delta_col = 1.0 / delta_col         # exact reciprocal, wrapper-side

    kernel = functools.partial(adaround_kernel,
                               soft_targets=soft_targets,
                               n_levels=n_levels)

    n_elem = OC * K
    cost = pl.CostEstimate(
        flops=8 * n_elem,
        transcendentals=n_elem if soft_targets else 0,
        bytes_accessed=12 * n_elem)

    if TN == K:
        grid = (pl.cdiv(OC, TM),)
        big_map = lambda i: (i, 0)
        col_map = lambda i: (i, 0)
        dims = ("parallel",)
    else:
        grid = (pl.cdiv(OC, TM), pl.cdiv(K, TN))
        big_map = lambda i, j: (i, j)
        col_map = lambda i, j: (i, 0)
        dims = ("parallel", "parallel")

    out = pl.pallas_call(
        kernel,
        out_shape=jax.ShapeDtypeStruct((OC, K), jnp.float32),
        grid=grid,
        in_specs=[
            pl.BlockSpec((TM, TN), big_map),   # x
            pl.BlockSpec((TM, TN), big_map),   # alpha
            pl.BlockSpec((TM, 1), col_map),    # 1/delta (per-OC)
            pl.BlockSpec((TM, 1), col_map),    # delta    (per-OC)
            pl.BlockSpec((TM, 1), col_map),    # zero_point
        ],
        out_specs=pl.BlockSpec((TM, TN), big_map),
        compiler_params=pltpu.CompilerParams(
            dimension_semantics=dims,
            vmem_limit_bytes=vmem_limit),
        cost_estimate=cost,
    )(x_flat, alpha_flat, inv_delta_col, delta_col, zp_col)

    return out


# ----------------------- plain-JAX glue / parameter init -------------------
def init_uniform_affine_params(w_flat, n_bits):
    """Per-output-channel linear min-max params (UniformAffineQuantizer)."""
    n_levels = 2 ** n_bits
    x_min = jnp.minimum(jnp.min(w_flat, axis=1, keepdims=True), 0.0)
    x_max = jnp.maximum(jnp.max(w_flat, axis=1, keepdims=True), 0.0)
    delta = (x_max - x_min) / (n_levels - 1)
    delta = jnp.maximum(delta, 1e-8)
    zero_point = jnp.round(-x_min / delta)
    return delta.astype(jnp.float32), zero_point.astype(jnp.float32), n_levels


def init_alpha(w_flat, delta_col):
    """AdaRoundQuantizer.init_alpha for the linear scale methods."""
    x_floor = jnp.floor(w_flat / delta_col)
    rest = w_flat / delta_col - x_floor
    rest = jnp.clip(rest, 1e-6, 1.0 - 1e-6)   # keep logit finite
    alpha = -jnp.log((ZETA - GAMMA) / (rest - GAMMA) - 1.0)
    return alpha.astype(jnp.float32)


def reference_forward(x_flat, alpha_flat, delta_col, zp_col,
                      *, soft_targets, n_levels):
    # Matches the PyTorch module's math.  x/delta is written as x*(1/delta)
    # (same formulation as the kernel) so the comparison is not sensitive to
    # 1-ULP floor flips exactly at bin boundaries; the soft-target branch uses
    # the standard sigmoid to verify the kernel's tanh-identity is within tol.
    inv_delta = 1.0 / delta_col
    x_floor = jnp.floor(x_flat * inv_delta)
    if soft_targets:
        h = jnp.clip(jax.nn.sigmoid(alpha_flat) * (ZETA - GAMMA) + GAMMA, 0.0, 1.0)
    else:
        h = (alpha_flat >= 0.0).astype(x_flat.dtype)
    x_quant = jnp.clip(x_floor + h + zp_col, 0.0, n_levels - 1)
    return (x_quant - zp_col) * delta_col


# ---------------------------------- main ------------------------------------
if __name__ == "__main__":
    key = jax.random.PRNGKey(0)
    n_bits = 4
    ok = True

    # Case 1: conv weight OIHW (8,4,4,4) -> single full-row block (K=64).
    # Case 2: OC=40, K=54 -> ragged OC blocks + full-row K not multiple of 128.
    # Case 3: OC=16, K=1100 with a forced small block budget -> 2-D tiled grid
    #         with a ragged last K block.
    test_cases = [
        dict(shape=(8, 4 * 4 * 4), block_elem_cap=None),
        dict(shape=(40, 6 * 3 * 3), block_elem_cap=None),
        dict(shape=(16, 1100), block_elem_cap=8 * 1024),
    ]

    for tc in test_cases:
        key, sub = jax.random.split(key)
        OC, K = tc["shape"]
        w_flat = 0.1 * jax.random.normal(sub, (OC, K), dtype=jnp.float32)

        delta_col, zp_col, n_levels = init_uniform_affine_params(w_flat, n_bits)
        alpha_flat = init_alpha(w_flat, delta_col)

        for soft in (False, True):
            out = adaround_forward(w_flat, alpha_flat, delta_col, zp_col,
                                   soft_targets=soft, n_levels=n_levels,
                                   block_elem_cap=tc["block_elem_cap"])
            out = jax.block_until_ready(out)
            ref = reference_forward(w_flat, alpha_flat, delta_col, zp_col,
                                    soft_targets=soft, n_levels=n_levels)
            ok &= bool(jnp.allclose(out, ref, atol=1e-5, rtol=1e-5))

    # Glue: reshape the first conv case back to OIHW.
    OC, IC, KH, KW = 8, 4, 4, 4
    w0 = 0.1 * jax.random.normal(jax.random.PRNGKey(0), (OC, IC, KH, KW),
                                 dtype=jnp.float32)
    wf = w0.reshape(OC, IC * KH * KW)
    d0, z0, nl0 = init_uniform_affine_params(wf, n_bits)
    a0 = init_alpha(wf, d0)
    deq = adaround_forward(wf, a0, d0, z0, soft_targets=False, n_levels=nl0)
    _ = jax.block_until_ready(deq).reshape(OC, IC, KH, KW)

    print("KERNEL_OK" if ok else "MISMATCH")
</pallas_src>

<mosaic_0001>
module attributes {stable_mosaic.version = 11 : i64} {
  func.func @adaround_kernel(%arg0: i32, %arg1: memref<8x64xf32, #tpu.memory_space<vmem>>, %arg2: memref<8x64xf32, #tpu.memory_space<vmem>>, %arg3: memref<8x1xf32, #tpu.memory_space<vmem>>, %arg4: memref<8x1xf32, #tpu.memory_space<vmem>>, %arg5: memref<8x1xf32, #tpu.memory_space<vmem>>, %arg6: memref<8x64xf32, #tpu.memory_space<vmem>>) attributes {dimension_semantics = [#tpu.dimension_semantics<parallel>], iteration_bounds = array<i64: 1>, scalar_prefetch = 0 : i64, scratch_operands = 0 : i64, tpu.core_type = #tpu.core_type<tc>, window_params = [{transform_indices = @transform_0, window_bounds = array<i64: 8, 64>}, {transform_indices = @transform_1, window_bounds = array<i64: 8, 64>}, {transform_indices = @transform_2, window_bounds = array<i64: 8, 1>}, {transform_indices = @transform_3, window_bounds = array<i64: 8, 1>}, {transform_indices = @transform_4, window_bounds = array<i64: 8, 1>}, {transform_indices = @transform_5, window_bounds = array<i64: 8, 64>}]} {
    %c0 = arith.constant 0 : index
    %c0_0 = arith.constant 0 : index
    %0 = vector.load %arg1[%c0, %c0_0] : memref<8x64xf32, #tpu.memory_space<vmem>>, vector<8x64xf32>
    %c0_1 = arith.constant 0 : index
    %c0_2 = arith.constant 0 : index
    %1 = vector.load %arg3[%c0_1, %c0_2] : memref<8x1xf32, #tpu.memory_space<vmem>>, vector<8x1xf32>
    %c0_3 = arith.constant 0 : index
    %c0_4 = arith.constant 0 : index
    %2 = vector.load %arg4[%c0_3, %c0_4] : memref<8x1xf32, #tpu.memory_space<vmem>>, vector<8x1xf32>
    %c0_5 = arith.constant 0 : index
    %c0_6 = arith.constant 0 : index
    %3 = vector.load %arg5[%c0_5, %c0_6] : memref<8x1xf32, #tpu.memory_space<vmem>>, vector<8x1xf32>
    %4 = vector.broadcast %1 : vector<8x1xf32> to vector<8x64xf32>
    %5 = arith.mulf %0, %4 : vector<8x64xf32>
    %6 = math.floor %5 : vector<8x64xf32>
    %c0_7 = arith.constant 0 : index
    %c0_8 = arith.constant 0 : index
    %7 = vector.load %arg2[%c0_7, %c0_8] : memref<8x64xf32, #tpu.memory_space<vmem>>, vector<8x64xf32>
    %cst = arith.constant 0.000000e+00 : f32
    %8 = vector.broadcast %cst : f32 to vector<8x64xf32>
    %9 = arith.cmpf oge, %7, %8 : vector<8x64xf32>
    %10 = arith.extui %9 : vector<8x64xi1> to vector<8x64xi32>
    %11 = arith.sitofp %10 : vector<8x64xi32> to vector<8x64xf32>
    %12 = arith.addf %6, %11 : vector<8x64xf32>
    %13 = vector.broadcast %3 : vector<8x1xf32> to vector<8x64xf32>
    %14 = arith.addf %12, %13 : vector<8x64xf32>
    %cst_9 = arith.constant 0.000000e+00 : f32
    %cst_10 = arith.constant 1.500000e+01 : f32
    %15 = vector.broadcast %cst_9 : f32 to vector<8x64xf32>
    %16 = arith.maximumf %15, %14 : vector<8x64xf32>
    %17 = vector.broadcast %cst_10 : f32 to vector<8x64xf32>
    %18 = arith.minimumf %17, %16 : vector<8x64xf32>
    %19 = vector.broadcast %3 : vector<8x1xf32> to vector<8x64xf32>
    %20 = arith.subf %18, %19 : vector<8x64xf32>
    %21 = vector.broadcast %2 : vector<8x1xf32> to vector<8x64xf32>
    %22 = arith.mulf %20, %21 : vector<8x64xf32>
    %c0_11 = arith.constant 0 : index
    %c0_12 = arith.constant 0 : index
    %23 = vector.load %arg6[%c0_11, %c0_12] : memref<8x64xf32, #tpu.memory_space<vmem>>, vector<8x64xf32>
    tpu.vector_store %arg6[%c0_11, %c0_12], %22 {strides = array<i32>} : memref<8x64xf32, #tpu.memory_space<vmem>>, vector<8x64xf32>,
    return
  }
  func.func @transform_0(%arg0: i32) -> (i32, i32) {
    %c0_i32 = arith.constant 0 : i32
    %c0_i32_0 = arith.constant 0 : i32
    return %arg0, %c0_i32 : i32, i32
  }
  func.func @transform_1(%arg0: i32) -> (i32, i32) {
    %c0_i32 = arith.constant 0 : i32
    %c0_i32_0 = arith.constant 0 : i32
    return %arg0, %c0_i32 : i32, i32
  }
  func.func @transform_2(%arg0: i32) -> (i32, i32) {
    %c0_i32 = arith.constant 0 : i32
    %c0_i32_0 = arith.constant 0 : i32
    return %arg0, %c0_i32 : i32, i32
  }
  func.func @transform_3(%arg0: i32) -> (i32, i32) {
    %c0_i32 = arith.constant 0 : i32
    %c0_i32_0 = arith.constant 0 : i32
    return %arg0, %c0_i32 : i32, i32
  }
  func.func @transform_4(%arg0: i32) -> (i32, i32) {
    %c0_i32 = arith.constant 0 : i32
    %c0_i32_0 = arith.constant 0 : i32
    return %arg0, %c0_i32 : i32, i32
  }
  func.func @transform_5(%arg0: i32) -> (i32, i32) {
    %c0_i32 = arith.constant 0 : i32
    %c0_i32_0 = arith.constant 0 : i32
    return %arg0, %c0_i32 : i32, i32
  }
}

</mosaic_0001>

<llo_original>
// kernel: tpu_custom_call.1
$region0: #{tpu_custom_call.1}
  #allocation0 [shape = 'u32[]', space=smem, size = 0x4, offset = 0x4, fixed_abs, tag = 'smem constant byte address 0x4 - core index']
  #allocation1 [shape = 'u32[72,128]{1,0:T(1,128)}', space=vmem, size = 0x9000, scoped, tag = 'internal scratch']
  %s0 = inlined_call_operand.vmem [shape: f32[8,64], index: 0, kind: input, shape index: {}]
  %s1 = inlined_call_operand.vmem [shape: f32[8,64], index: 1, kind: input, shape index: {}]
  %s2 = inlined_call_operand.vmem [shape: f32[8,1], index: 2, kind: input, shape index: {}]
  %s3 = inlined_call_operand.vmem [shape: f32[8,1], index: 3, kind: input, shape index: {}]
  %s4 = inlined_call_operand.vmem [shape: f32[8,1], index: 4, kind: input, shape index: {}]
  %s5 = inlined_call_operand.hbm [shape: f32[8,64], index: 5, kind: output, shape index: {}]
  %s6 = sld [smem:[#allocation0]]
  $region30: #{tpu_custom_call.1} parent=0
    _
  %s8 = ssub.s32 1, %s6
  %s9 = scalar_select 0, %s8, %s6
  $region1: #{tpu_custom_call.1} parent=0
    #allocation2 [shape = 'u8[4096]{0}', space=vmem, size = 0x1000, scoped, tag = 'output window, operand 0, single buffered']
    #allocation3 [shape = 's32[1]{0}', space=sflag, size = 0x4, scoped, tag = 'scoped memory for tpu_custom_call.1']
    %10 = vsyncpa [#allocation3], 0
    // Predicated region
    $region2: #{tpu_custom_call.1} parent=1 // pred_check
      _
    $region3: #{tpu_custom_call.1} parent=1 // pred_check_branch
      %12 = sbr.rel (0) target = $region5
    $region4: #{tpu_custom_call.1} parent=1 // pred_region
      _
    $region5: #{tpu_custom_call.1} parent=1 // pred_fallthru
      _
    // Predicated region
    $region6: #{tpu_custom_call.1} parent=1 // pred_check
      _
    $region7: #{tpu_custom_call.1} parent=1 // pred_check_branch
      %14 = sbr.rel (0) target = $region9
    $region8: #{tpu_custom_call.1} parent=1 // pred_region
      _
    $region9: #{tpu_custom_call.1} parent=1 // pred_fallthru
      _
    // Predicated region
    $region10: #{tpu_custom_call.1} parent=1 // pred_check
      _
    $region11: #{tpu_custom_call.1} parent=1 // pred_check_branch
      %16 = sbr.rel (0) target = $region13
    $region12: #{tpu_custom_call.1} parent=1 // pred_region
      _
    $region13: #{tpu_custom_call.1} parent=1 // pred_fallthru
      _
    // Predicated region
    $region14: #{tpu_custom_call.1} parent=1 // pred_check
      _
    $region15: #{tpu_custom_call.1} parent=1 // pred_check_branch
      %18 = sbr.rel (0) target = $region17
    $region16: #{tpu_custom_call.1} parent=1 // pred_region
      _
    $region17: #{tpu_custom_call.1} parent=1 // pred_fallthru
      _
    // Predicated region
    $region18: #{tpu_custom_call.1} parent=1 // pred_check
      _
    $region19: #{tpu_custom_call.1} parent=1 // pred_check_branch
      %20 = sbr.rel (0) target = $region21
    $region20: #{tpu_custom_call.1} parent=1 // pred_region
      _
    $region21: #{tpu_custom_call.1} parent=1 // pred_fallthru
      _
    %v21 = vld [vmem:[%s0] sm:$0xff]
    %v22 = vld [vmem:[%s2] sm:$0xff]
    %v23 = vld [vmem:[%s3] sm:$0xff]
    %v24 = vld [vmem:[%s4] sm:$0xff]
    %26 = vset.pattern.permute.xlu0 0
    %27 = vperm.xlu0 %26, %v22
    %v28 = vpop.permute.xlu0 %27
    %v30 = vmul.f32 %v21, %v28
    %v31 = vfloor.f32 %v30
    %v32 = vld [vmem:[%s1] sm:$0xff]
    %vm33 = vcmp.ge.f32.partialorder %v32, 0.0
    %v34 = vsel %vm33, 1, 0
    %v35 = vcvt.s32.f32 %v34
    %v36 = vadd.f32 %v31, %v35
    %38 = vset.pattern.permute.xlu0 0
    %39 = vperm.xlu0 %38, %v24
    %v40 = vpop.permute.xlu0 %39
    %v42 = vadd.f32 %v36, %v40
    %v43 = vmax.f32 %v42, 0.0
    %v44 = vmin.f32 %v43, 15.0
    %v45 = vsub.f32 %v44, %v40
    %47 = vset.pattern.permute.xlu0 0
    %48 = vperm.xlu0 %47, %v23
    %v49 = vpop.permute.xlu0 %48
    %v51 = vmul.f32 %v45, %v49
    %vm52 = vcmask 523264
    %53 = vst.msk [vmem:[#allocation2] sm:$0xff] %vm52, %v51
    // Predicated region
    $region22: #{tpu_custom_call.1} parent=1 // pred_check
      _
    $region23: #{tpu_custom_call.1} parent=1 // pred_check_branch
      %55 = sbr.rel (0) target = $region25
    $region24: #{tpu_custom_call.1} parent=1 // pred_region
      %57 = vsyncadd [#allocation3], 0
      %s59 = sshll.u32 [#allocation2], 4
      %s60 = int_to_ptr.vmem [resolvable:$true] %s59
      %s61 = sshll.u32 %s5, 4
      %s62 = int_to_ptr.hbm [resolvable:$true] %s61
      %64 = dma.vmem_to_hbm [thread:$0]  %s60, 128, %s62, [#allocation3]
    $region25: #{tpu_custom_call.1} parent=1 // pred_fallthru
      _
    // Predicated region
    $region26: #{tpu_custom_call.1} parent=1 // pred_check
      _
    $region27: #{tpu_custom_call.1} parent=1 // pred_check_branch
      %66 = sbr.rel (0) target = $region29
    $region28: #{tpu_custom_call.1} parent=1 // pred_region
      %68 = dma.done [#allocation3], 128
    $region29: #{tpu_custom_call.1} parent=1 // pred_fallthru
      _
    %69 = vsyncpa [#allocation3], 1

</llo_original>
